<compile_context>
chip_gen: v7x
topology: tpu7x:2x2x1
jax: 0.10.0
libtpu: 0.0.40
codegen_flags: <defaults>
</compile_context>

<pallas_src>
import math
import functools

import numpy as np
import jax
import jax.numpy as jnp
from jax.experimental import pallas as pl
from jax.experimental.pallas import tpu as pltpu


LANE = 128
MAX_TILE_LANES = 2048           # 512-2048 lane tiles reach ~85% of HBM roofline
TARGET_GRID_STEPS = 8           # keep >= ~8 steps: double-buffering + v7x 2-TC sharding
VMEM_BUDGET = 12 * 1024 * 1024  # stay well under v5e's 16 MiB scoped-VMEM default


# ---------------------------------------------------------------------------
# Kernels
# ---------------------------------------------------------------------------
def _add_pe(x, pe):
    """x: (R, TL); pe: (1 | k, TL) with R % k == 0. PE broadcast/tiled over rows."""
    if pe.shape[0] in (1, x.shape[0]):
        return x + pe
    return x + jnp.tile(pe, (x.shape[0] // pe.shape[0], 1))


def _pe_add_kernel(x_ref, pe_ref, o_ref):
    o_ref[...] = _add_pe(x_ref[...], pe_ref[...])


def _pe_add_dropout_prng_kernel(seed_ref, x_ref, pe_ref, o_ref, *, p_drop, num_tiles):
    # TPU-only path: inverted dropout with the on-chip PRNG.
    y = _add_pe(x_ref[...], pe_ref[...])
    # Seed spans (seed, tile) without collisions between adjacent seeds.
    pltpu.prng_seed(seed_ref[0] * num_tiles + pl.program_id(0))
    bits = pltpu.bitcast(pltpu.prng_random_bits(y.shape), jnp.uint32)
    thresh = jnp.uint32(min(int(p_drop * (2.0 ** 32)), 2 ** 32 - 1))
    keep = bits >= thresh
    scale = jnp.float32(1.0 / (1.0 - p_drop))                 # keep/scale math in f32
    y_scaled = (y.astype(jnp.float32) * scale).astype(y.dtype)
    o_ref[...] = jnp.where(keep, y_scaled, jnp.zeros_like(y))


def _pe_add_dropout_mask_kernel(x_ref, pe_ref, m_ref, o_ref):
    # Portable fallback (no TPU stateful PRNG): mask already holds keep/(1-p).
    o_ref[...] = (_add_pe(x_ref[...], pe_ref[...]) * m_ref[...]).astype(o_ref.dtype)


# ---------------------------------------------------------------------------
# Cached sinusoidal table (torch "registered buffer" equivalent)
# ---------------------------------------------------------------------------
@functools.lru_cache(maxsize=64)
def _pe_table(seq_len, d_model, dtype_name):
    pos = np.arange(seq_len, dtype=np.float32)[:, None]
    div_term = np.exp(
        np.arange(0, d_model, 2, dtype=np.float32) / d_model * (-math.log(10000.0))
    )[None, :]
    pe = np.zeros((seq_len, d_model), dtype=np.float32)
    pe[:, 0::2] = np.sin(pos * div_term)
    pe[:, 1::2] = np.cos(pos * div_term)
    return jnp.asarray(pe, dtype=jnp.dtype(dtype_name))


# ---------------------------------------------------------------------------
# Tiling / layout
# ---------------------------------------------------------------------------
def _choose_layout(B, total, itemsize):
    # Fold rows when B < 8 (avoid wasted sublane padding), but only if the
    # folded lane axis stays wide enough to tile densely and multi-step.
    fold = 1
    if B < 8:
        k = 8 // B
        if k > 1 and total % k == 0 and (total // k) >= 8 * LANE:
            fold = k
    rows = B * fold
    cols = total // fold

    if cols <= LANE:
        tl = cols                                   # full-extent block (legal at any width)
    else:
        rows_pad = ((rows + 7) // 8) * 8
        # ~8 buffers worth of (rows_pad, tl) blocks (double-buffered x/out/pe/mask)
        budget_tl = max(LANE, (VMEM_BUDGET // (8 * rows_pad * itemsize)) // LANE * LANE)
        tl = (pl.cdiv(cols, TARGET_GRID_STEPS) // LANE) * LANE
        tl = max(LANE, min(tl, MAX_TILE_LANES, budget_tl, (cols // LANE) * LANE))
    num_tiles = int(pl.cdiv(cols, tl))              # ragged tail masked on the output store
    return fold, rows, cols, tl, num_tiles


# ---------------------------------------------------------------------------
# Wrapper
# ---------------------------------------------------------------------------
def positional_encoding(x, seed=0, *, training=False, p_drop=0.1, in_place=False):
    """x: (B, S, D). Returns dropout(x + PE[:S, :]) (dropout only if training)."""
    B, S, D = x.shape
    assert D % 2 == 0, "d_model must be even (as in the PyTorch module)"
    dtype = x.dtype
    itemsize = jnp.dtype(dtype).itemsize
    total = S * D

    pe = _pe_table(S, D, jnp.dtype(dtype).name)     # cached, no per-call transcendentals
    fold, rows, cols, tl, num_tiles = _choose_layout(B, total, itemsize)

    x2 = x.reshape(rows, cols)
    pe2 = pe.reshape(fold, cols)

    x_spec = pl.BlockSpec((rows, tl), lambda j: (0, j))
    pe_spec = pl.BlockSpec((fold, tl), lambda j: (0, j))
    out_spec = pl.BlockSpec((rows, tl), lambda j: (0, j))
    out_shape = jax.ShapeDtypeStruct((rows, cols), dtype)
    cparams = pltpu.CompilerParams(dimension_semantics=("parallel",))
    cost = pl.CostEstimate(
        flops=2 * rows * cols,
        transcendentals=0,
        bytes_accessed=(2 * rows + fold) * cols * itemsize,
    )
    io_alias = {0: 0} if in_place else {}

    use_dropout = bool(training) and p_drop > 0.0
    if not use_dropout:
        out2 = pl.pallas_call(
            _pe_add_kernel,
            out_shape=out_shape,
            grid_spec=pltpu.PrefetchScalarGridSpec(
                num_scalar_prefetch=0,
                grid=(num_tiles,),
                in_specs=[x_spec, pe_spec],
                out_specs=out_spec,
            ),
            compiler_params=cparams,
            cost_estimate=cost,
            input_output_aliases=io_alias,
        )(x2, pe2)
    elif jax.default_backend() == "tpu":
        # In-kernel hardware-PRNG dropout (TPU backend only).
        seed_arr = jnp.array([seed], dtype=jnp.int32)
        kernel = functools.partial(
            _pe_add_dropout_prng_kernel, p_drop=float(p_drop), num_tiles=num_tiles)
        out2 = pl.pallas_call(
            kernel,
            out_shape=out_shape,
            grid_spec=pltpu.PrefetchScalarGridSpec(
                num_scalar_prefetch=1,
                grid=(num_tiles,),
                in_specs=[
                    pl.BlockSpec((rows, tl), lambda j, s: (0, j)),
                    pl.BlockSpec((fold, tl), lambda j, s: (0, j)),
                ],
                out_specs=pl.BlockSpec((rows, tl), lambda j, s: (0, j)),
            ),
            compiler_params=cparams,
            cost_estimate=cost,
        )(seed_arr, x2, pe2)
    else:
        # TODO(synk): torch-RNG-bit-exact dropout is not reproducible; portable
        # fallback streams a precomputed keep/(1-p) mask (non-TPU / interpret mode).
        keep = jax.random.bernoulli(jax.random.PRNGKey(seed), 1.0 - p_drop, (rows, cols))
        mask = (keep.astype(jnp.float32) / (1.0 - p_drop)).astype(dtype)
        out2 = pl.pallas_call(
            _pe_add_dropout_mask_kernel,
            out_shape=out_shape,
            grid_spec=pltpu.PrefetchScalarGridSpec(
                num_scalar_prefetch=0,
                grid=(num_tiles,),
                in_specs=[x_spec, pe_spec, pl.BlockSpec((rows, tl), lambda j: (0, j))],
                out_specs=out_spec,
            ),
            compiler_params=cparams,
            cost_estimate=cost,
            input_output_aliases=io_alias,
        )(x2, pe2, mask)

    return out2.reshape(B, S, D)


# ---------------------------------------------------------------------------
# Pure-JAX reference (mirrors the PyTorch __init__/forward math, eval mode)
# ---------------------------------------------------------------------------
def _reference(x):
    B, S, D = x.shape
    pos = jnp.arange(S, dtype=jnp.float32)[:, None]
    div_term = jnp.exp(
        jnp.arange(0, D, 2, dtype=jnp.float32) / D * (-math.log(10000.0))
    )[None, :]
    pe = jnp.zeros((S, D), dtype=jnp.float32)
    pe = pe.at[:, 0::2].set(jnp.sin(pos * div_term))
    pe = pe.at[:, 1::2].set(jnp.cos(pos * div_term))
    return x + pe[None, :, :].astype(x.dtype)


if __name__ == "__main__":
    p_drop = 0.1

    # (1) Small shape implied by the module (batch=2, seq=8, d_model=32), eval mode.
    B, S, D = 2, 8, 32
    x = jax.random.normal(jax.random.PRNGKey(0), (B, S, D), dtype=jnp.float32)
    out = jax.block_until_ready(positional_encoding(x, training=False))
    ref = _reference(x)
    assert out.shape == x.shape and out.dtype == x.dtype
    assert jnp.allclose(out, ref, atol=1e-5, rtol=1e-5), "eval mismatch (small shape)"

    # (2) Multi-tile grid with a ragged tail (total=480 lanes -> 4 tiles of 128).
    xb = jax.random.normal(jax.random.PRNGKey(1), (3, 10, 48), dtype=jnp.float32)
    outb = jax.block_until_ready(positional_encoding(xb, training=False))
    assert jnp.allclose(outb, _reference(xb), atol=1e-5, rtol=1e-5), "ragged-tail mismatch"

    # (3) Shape that exercises the small-B row folding (2x8192 -> 8x2048, 8 tiles).
    xc = jax.random.normal(jax.random.PRNGKey(2), (2, 256, 32), dtype=jnp.float32)
    outc = jax.block_until_ready(positional_encoding(xc, training=False))
    assert jnp.allclose(outc, _reference(xc), atol=1e-5, rtol=1e-5), "fold-path mismatch"

    # (4) Training-mode check: dropped entries are 0, kept entries are (x+PE)/(1-p).
    out_tr = jax.block_until_ready(
        positional_encoding(x, seed=123, training=True, p_drop=p_drop))
    assert out_tr.shape == x.shape and out_tr.dtype == x.dtype
    drop_frac = float(jnp.mean((out_tr == 0).astype(jnp.float32)))
    assert drop_frac < 0.5, f"dropout rate too high: {drop_frac}"
    kept = out_tr != 0
    assert jnp.allclose(jnp.where(kept, out_tr * (1.0 - p_drop), 0.0),
                        jnp.where(kept, ref, 0.0), atol=1e-4, rtol=1e-4), \
        "kept entries not scaled by 1/(1-p)"

    print("KERNEL_OK")
</pallas_src>

<mosaic_0001>
module attributes {stable_mosaic.version = 11 : i64} {
  func.func @_pe_add_kernel(%arg0: i32, %arg1: memref<2x128xf32, #tpu.memory_space<vmem>>, %arg2: memref<1x128xf32, #tpu.memory_space<vmem>>, %arg3: memref<2x128xf32, #tpu.memory_space<vmem>>) attributes {dimension_semantics = [#tpu.dimension_semantics<parallel>], iteration_bounds = array<i64: 2>, scalar_prefetch = 0 : i64, scratch_operands = 0 : i64, tpu.core_type = #tpu.core_type<tc>, window_params = [{transform_indices = @transform_0, window_bounds = array<i64: 2, 128>}, {transform_indices = @transform_1, window_bounds = array<i64: 1, 128>}, {transform_indices = @transform_2, window_bounds = array<i64: 2, 128>}]} {
    %c0 = arith.constant 0 : index
    %c0_0 = arith.constant 0 : index
    %0 = vector.load %arg1[%c0, %c0_0] : memref<2x128xf32, #tpu.memory_space<vmem>>, vector<2x128xf32>
    %c0_1 = arith.constant 0 : index
    %c0_2 = arith.constant 0 : index
    %1 = vector.load %arg2[%c0_1, %c0_2] : memref<1x128xf32, #tpu.memory_space<vmem>>, vector<1x128xf32>
    %2 = vector.broadcast %1 : vector<1x128xf32> to vector<2x128xf32>
    %3 = arith.addf %0, %2 : vector<2x128xf32>
    %c0_3 = arith.constant 0 : index
    %c0_4 = arith.constant 0 : index
    %4 = vector.load %arg3[%c0_3, %c0_4] : memref<2x128xf32, #tpu.memory_space<vmem>>, vector<2x128xf32>
    tpu.vector_store %arg3[%c0_3, %c0_4], %3 {strides = array<i32>} : memref<2x128xf32, #tpu.memory_space<vmem>>, vector<2x128xf32>,
    return
  }
  func.func @transform_0(%arg0: i32) -> (i32, i32) {
    %c0_i32 = arith.constant 0 : i32
    %c0_i32_0 = arith.constant 0 : i32
    return %c0_i32, %arg0 : i32, i32
  }
  func.func @transform_1(%arg0: i32) -> (i32, i32) {
    %c0_i32 = arith.constant 0 : i32
    %c0_i32_0 = arith.constant 0 : i32
    return %c0_i32, %arg0 : i32, i32
  }
  func.func @transform_2(%arg0: i32) -> (i32, i32) {
    %c0_i32 = arith.constant 0 : i32
    %c0_i32_0 = arith.constant 0 : i32
    return %c0_i32, %arg0 : i32, i32
  }
}

</mosaic_0001>

<llo_original>
// kernel: tpu_custom_call.1
$region0: #{tpu_custom_call.1}
  #allocation0 [shape = 'u32[]', space=smem, size = 0x4, offset = 0x4, fixed_abs, tag = 'smem constant byte address 0x4 - core index']
  #allocation1 [shape = 'u32[144,128]{1,0:T(1,128)}', space=vmem, size = 0x12000, scoped, tag = 'internal scratch']
  %s0 = inlined_call_operand.hbm [shape: f32[2,256], index: 0, kind: input, shape index: {}]
  %s1 = inlined_call_operand.vmem [shape: f32[1,256], index: 1, kind: input, shape index: {}]
  %s2 = inlined_call_operand.hbm [shape: f32[2,256], index: 2, kind: output, shape index: {}]
  %s3 = sld [smem:[#allocation0]]
  $region45: #{tpu_custom_call.1} parent=0
    _
  %s5 = ssub.s32 1, %s3
  %s6 = scalar_select 0, %s5, %s3
  $region1: #{tpu_custom_call.1} parent=0
    #allocation2 [shape = 'u8[2048]{0}', space=vmem, size = 0x800, scoped, tag = 'input window, operand 0']
    #allocation3 [shape = 's32[2]{0}', space=sflag, size = 0x8, scoped, tag = 'scoped memory for tpu_custom_call.1']
    #allocation4 [shape = 's32[2]{0}', space=sflag, size = 0x8, scoped, tag = 'scoped memory for tpu_custom_call.1']
    #allocation5 [shape = 'u8[2048]{0}', space=vmem, size = 0x800, scoped, tag = 'output window, operand 0']
    %7 = vsyncpa [#allocation3], 0
    %s8 = scalar_lea.sflag [#allocation3], 1
    %9 = vsyncpa %s8, 0
    %10 = vsyncpa [#allocation4], 0
    %s11 = scalar_lea.sflag [#allocation4], 1
    %12 = vsyncpa %s11, 0
    loop: start=0, step=1, limit=4
    $region2: #{tpu_custom_call.1} parent=1 // loop_pre_header
      _
    $region3: #{tpu_custom_call.1} parent=1 // loop_header
      %s14 = sphi 0, %s18
      %p15 = scmp.ge.s32.totalorder %s14, 4
      %s24 = sphi 0, %s26
      %s27 = sphi 0, %s24
      %s28 = sphi 0, %s27
      %s44 = sphi 0, %s28
      %s50 = sphi 0, %s52
      %s53 = sphi 0, %s50
      %s54 = sphi 0, %s53
      %s70 = sphi 0, %s54
      %s76 = sphi 0, %s78
      %s79 = sphi 0, %s76
      %s80 = sphi 0, %s79
      %s96 = sphi 0, %s80
    $region4: #{tpu_custom_call.1} parent=1 // loop_header_branch
      %17 = sbr.rel (%p15) target = $region8
    $region5: #{tpu_custom_call.1} parent=1 // loop_body
      %s19 = ssub.s32 %s14, 1
      %s20 = ssub.s32 %s14, 2
      %s21 = sadd.s32 %s14, 1
      %s22 = ssub.s32 %s14, %s21
      %p23 = scmp.eq.s32.totalorder %s22, 0
      %s25 = sadd.s32 %s24, 1
      %s26 = scalar_select %p23, %s24, %s25
      %p29 = pneg %p23
      %p30 = scmp.eq.s32.totalorder %s14, 1
      %p31 = por %p29, %p30
      %p32 = scmp.ne.s32.totalorder %s24, %s27
      %p33 = scmp.eq.s32.totalorder %s14, 0
      %p34 = por %p32, %p33
      %p35 = scmp.ne.s32.totalorder %s24, %s27
      %p36 = scmp.eq.s32.totalorder %s19, 1
      %p37 = por %p35, %p36
      %p38 = scmp.ne.s32.totalorder %s27, %s28
      %p39 = scmp.eq.s32.totalorder %s19, 0
      %p40 = por %p38, %p39
      %p41 = scmp.ne.s32.totalorder %s27, %s28
      %p42 = scmp.eq.s32.totalorder %s20, 1
      %p43 = por %p41, %p42
      %p45 = scmp.ne.s32.totalorder %s28, %s44
      %p46 = scmp.eq.s32.totalorder %s20, 0
      %p47 = por %p45, %p46
      %s48 = ssub.s32 %s14, %s21
      %p49 = scmp.eq.s32.totalorder %s48, 0
      %s51 = sadd.s32 %s50, 1
      %s52 = scalar_select %p49, %s50, %s51
      %p55 = pneg %p49
      %p56 = scmp.eq.s32.totalorder %s14, 1
      %p57 = por %p55, %p56
      %p58 = scmp.ne.s32.totalorder %s50, %s53
      %p59 = scmp.eq.s32.totalorder %s14, 0
      %p60 = por %p58, %p59
      %p61 = scmp.ne.s32.totalorder %s50, %s53
      %p62 = scmp.eq.s32.totalorder %s19, 1
      %p63 = por %p61, %p62
      %p64 = scmp.ne.s32.totalorder %s53, %s54
      %p65 = scmp.eq.s32.totalorder %s19, 0
      %p66 = por %p64, %p65
      %p67 = scmp.ne.s32.totalorder %s53, %s54
      %p68 = scmp.eq.s32.totalorder %s20, 1
      %p69 = por %p67, %p68
      %p71 = scmp.ne.s32.totalorder %s54, %s70
      %p72 = scmp.eq.s32.totalorder %s20, 0
      %p73 = por %p71, %p72
      %s74 = ssub.s32 %s14, %s21
      %p75 = scmp.eq.s32.totalorder %s74, 0
      %s77 = sadd.s32 %s76, 1
      %s78 = scalar_select %p75, %s76, %s77
      %p81 = pneg %p75
      %p82 = scmp.eq.s32.totalorder %s14, 1
      %p83 = por %p81, %p82
      %p84 = scmp.ne.s32.totalorder %s76, %s79
      %p85 = scmp.eq.s32.totalorder %s14, 0
      %p86 = por %p84, %p85
      %p87 = scmp.ne.s32.totalorder %s76, %s79
      %p88 = scmp.eq.s32.totalorder %s19, 1
      %p89 = por %p87, %p88
      %p90 = scmp.ne.s32.totalorder %s79, %s80
      %p91 = scmp.eq.s32.totalorder %s19, 0
      %p92 = por %p90, %p91
      %p93 = scmp.ne.s32.totalorder %s79, %s80
      %p94 = scmp.eq.s32.totalorder %s20, 1
      %p95 = por %p93, %p94
      %p97 = scmp.ne.s32.totalorder %s80, %s96
      %p98 = scmp.eq.s32.totalorder %s20, 0
      %p99 = por %p97, %p98
      %p100 = scmp.le.s32.totalorder 1, %s14
      %p101 = scmp.lt.s32.totalorder %s14, 3
      %p102 = pnand %p100, %p101
      %p103 = pneg %p102
      // Predicated region
      $region9: #{tpu_custom_call.1} parent=5 // pred_check
        _
      $region10: #{tpu_custom_call.1} parent=5 // pred_check_branch
        %105 = sbr.rel (%p102) target = $region12
      $region11: #{tpu_custom_call.1} parent=5 // pred_region
        %s106 = ssub.s32 %s14, 1
      $region12: #{tpu_custom_call.1} parent=5 // pred_fallthru
        _
      %p107 = scmp.lt.s32.totalorder %s14, 2
      // Predicated region
      $region13: #{tpu_custom_call.1} parent=5 // pred_check
        %p108 = pneg %p107
      $region14: #{tpu_custom_call.1} parent=5 // pred_check_branch
        %110 = sbr.rel (%p108) target = $region16
      $region15: #{tpu_custom_call.1} parent=5 // pred_region
        // Predicated region
        $region17: #{tpu_custom_call.1} parent=15 // pred_check
          %p111 = pneg %p34
        $region18: #{tpu_custom_call.1} parent=15 // pred_check_branch
          %113 = sbr.rel (%p111) target = $region20
        $region19: #{tpu_custom_call.1} parent=15 // pred_region
          %s114 = sand.u32 %s24, 1
          %s115 = scalar_lea.sflag [#allocation3], %s114
          %s116 = sand.u32 %s24, 1
          %s117 = smul.addr %s116, 2
          %s118 = scalar_lea.vmem [#allocation2], %s117
          %s120 = ssub.s32 32, 32
          %121 = vsyncadd %s115, %s120
          %s122 = smul.addr %s14, 32
          %s123 = scalar_lea.hbm %s0, %s122
          %s125 = sshll.u32 %s118, 4
          %s126 = int_to_ptr.vmem [resolvable:$true] %s125
          %128 = dma.hbm_to_vmem [thread:$0]  %s123, 32, %s126, %s115
        $region20: #{tpu_custom_call.1} parent=15 // pred_fallthru
          _
        // Predicated region
        $region21: #{tpu_custom_call.1} parent=15 // pred_check
          %p129 = pneg %p60
        $region22: #{tpu_custom_call.1} parent=15 // pred_check_branch
          %131 = sbr.rel (%p129) target = $region24
        $region23: #{tpu_custom_call.1} parent=15 // pred_region
          %p132 = scmp.lt.s32.totalorder %s14, 1
          %s133 = scalar_select %p132, %s14, 1
          %s134 = scalar_lea.vmem %s1, %s133
        $region24: #{tpu_custom_call.1} parent=15 // pred_fallthru
          _
      $region16: #{tpu_custom_call.1} parent=5 // pred_fallthru
        _
      %p135 = scmp.le.s32.totalorder 1, %s14
      %p136 = scmp.lt.s32.totalorder %s14, 3
      %p137 = pnand %p135, %p136
      %p138 = pneg %p137
      // Predicated region
      $region25: #{tpu_custom_call.1} parent=5 // pred_check
        _
      $region26: #{tpu_custom_call.1} parent=5 // pred_check_branch
        %140 = sbr.rel (%p137) target = $region28
      $region27: #{tpu_custom_call.1} parent=5 // pred_region
        %s141 = ssub.s32 %s14, 1
        %s142 = sand.u32 %s27, 1
        %s143 = scalar_lea.sflag [#allocation3], %s142
        %s144 = sand.u32 %s27, 1
        %s145 = smul.addr %s144, 2
        %s146 = scalar_lea.vmem [#allocation2], %s145
        // Predicated region
        $region29: #{tpu_custom_call.1} parent=27 // pred_check
          %p147 = pneg %p40
        $region30: #{tpu_custom_call.1} parent=27 // pred_check_branch
          %149 = sbr.rel (%p147) target = $region32
        $region31: #{tpu_custom_call.1} parent=27 // pred_region
          %150 = dma.done %s143, 32
        $region32: #{tpu_custom_call.1} parent=27 // pred_fallthru
          _
        %s151 = sand.u32 %s27, 1
        %s152 = scalar_lea.sflag [#allocation3], %s151
        %s153 = sand.u32 %s27, 1
        %s154 = smul.addr %s153, 2
        %s155 = scalar_lea.vmem [#allocation2], %s154
        %p156 = pneg %p40
        %p157 = pneg %p37
        %p158 = scmp.lt.s32.totalorder %s19, 1
        %s159 = scalar_select %p158, %s19, 1
        %s160 = scalar_lea.vmem %s1, %s159
        %p161 = pneg %p66
        %p162 = pneg %p63
        %p163 = pneg %p92
        %p164 = pneg %p89
        %s165 = sand.u32 %s79, 1
        %s166 = scalar_lea.sflag [#allocation4], %s165
        %s167 = sand.u32 %s79, 1
        %s168 = smul.addr %s167, 2
        %s169 = scalar_lea.vmem [#allocation5], %s168
        %p170 = scmp.lt.s32.totalorder %s19, 1
        %s171 = scalar_select %p170, %s19, 1
        %s172 = scalar_lea.vmem %s1, %s171
        %v173 = vld [vmem:[%s146] sm:$0x3]
        %v174 = vld [vmem:[%s172] sm:$0x1]
        %v176 = vlaneseq
        %v177 = vshrl.u32 %v176, 7
        %v178 = vsub.s32 0, %v177
        %v179 = vrot.slane %v174, %v178
        %v181 = vadd.f32 %v173, %v179
        %182 = vst [vmem:[%s169] sm:$0x3] %v181
        %s183 = sand.u32 %s79, 1
        %s184 = scalar_lea.sflag [#allocation4], %s183
        %s185 = sand.u32 %s79, 1
        %s186 = smul.addr %s185, 2
        %s187 = scalar_lea.vmem [#allocation5], %s186
        // Predicated region
        $region33: #{tpu_custom_call.1} parent=27 // pred_check
          %p188 = pneg %p89
        $region34: #{tpu_custom_call.1} parent=27 // pred_check_branch
          %190 = sbr.rel (%p188) target = $region36
        $region35: #{tpu_custom_call.1} parent=27 // pred_region
          %s192 = ssub.s32 32, 32
          %193 = vsyncadd %s184, %s192
          %s194 = smul.addr %s19, 32
          %s195 = scalar_lea.hbm %s2, %s194
          %s197 = sshll.u32 %s187, 4
          %s198 = int_to_ptr.vmem [resolvable:$true] %s197
          %200 = dma.vmem_to_hbm [thread:$0]  %s198, 32, %s195, %s184
        $region36: #{tpu_custom_call.1} parent=27 // pred_fallthru
          _
      $region28: #{tpu_custom_call.1} parent=5 // pred_fallthru
        _
      %p201 = scmp.le.s32.totalorder 2, %s14
      // Predicated region
      $region37: #{tpu_custom_call.1} parent=5 // pred_check
        %p202 = pneg %p201
      $region38: #{tpu_custom_call.1} parent=5 // pred_check_branch
        %204 = sbr.rel (%p202) target = $region40
      $region39: #{tpu_custom_call.1} parent=5 // pred_region
        %s205 = ssub.s32 %s14, 2
        // Predicated region
        $region41: #{tpu_custom_call.1} parent=39 // pred_check
          %p206 = pneg %p95
        $region42: #{tpu_custom_call.1} parent=39 // pred_check_branch
          %208 = sbr.rel (%p206) target = $region44
        $region43: #{tpu_custom_call.1} parent=39 // pred_region
          %s209 = sand.u32 %s80, 1
          %s210 = scalar_lea.sflag [#allocation4], %s209
          %s211 = sand.u32 %s80, 1
          %s212 = smul.addr %s211, 2
          %s213 = scalar_lea.vmem [#allocation5], %s212
          %214 = dma.done %s210, 32
        $region44: #{tpu_custom_call.1} parent=39 // pred_fallthru
          _
      $region40: #{tpu_custom_call.1} parent=5 // pred_fallthru
        _
    $region6: #{tpu_custom_call.1} parent=1 // loop_footer
      %s18 = sadd.s32 1, %s14
    $region7: #{tpu_custom_call.1} parent=1 // loop_footer_branch
      %13 = sbr.rel target = $region3
    $region8: #{tpu_custom_call.1} parent=1 // loop_exit
      _
    %215 = vsyncpa [#allocation3], 1
    %s216 = scalar_lea.sflag [#allocation3], 1
    %217 = vsyncpa %s216, 1
    %218 = vsyncpa [#allocation4], 1
    %s219 = scalar_lea.sflag [#allocation4], 1
    %220 = vsyncpa %s219, 1

</llo_original>
